<compile_context>
chip_gen: v7x
topology: tpu7x:2x2x1
jax: 0.10.0
libtpu: 0.0.40
codegen_flags: <defaults>
</compile_context>

<pallas_src>
import functools

import jax
import jax.numpy as jnp
from jax.experimental import pallas as pl
from jax.experimental.pallas import tpu as pltpu

BN_EPS = 1e-5
LEAKY_SLOPE = 0.1
VMEM_LIMIT = 32 * 1024 * 1024  # within the scoped default on v5e/v6e/v7x


def _conv_image(x_ref, w_ref, *, kh, kw, wp, m_cols):
    """Conv for one image as kh*kw shifted (C_out,C_in)x(C_in,m_cols) matmuls.

    x_ref: (C_in, Hp*Wp)        bf16  zero-padded image, spatial flattened (W minor)
    w_ref: (kh*kw, C_out, C_in) bf16  per-tap weights
    Returns a local f32 (C_out, m_cols) accumulator; column i = h*Wp + w holds
    the conv output at (h, w).  Columns with (i % Wp) >= W_out are don't-care.
    """
    acc = None
    for t in range(kh * kw):
        dy, dx = divmod(t, kw)
        off = dy * wp + dx
        xs = x_ref[:, off:off + m_cols]                       # (C_in, m_cols)
        tap = jnp.dot(w_ref[t], xs, preferred_element_type=jnp.float32)
        acc = tap if acc is None else acc + tap
    return acc


def _stats_kernel(x_ref, w_ref, stats_ref, *, kh, kw, wp, w_out, m_cols):
    """Pass 1: per-image BN partial sums; no conv intermediate touches HBM."""
    acc = _conv_image(x_ref, w_ref, kh=kh, kw=kw, wp=wp, m_cols=m_cols)
    col = jax.lax.broadcasted_iota(jnp.int32, acc.shape, 1)
    y = jnp.where(col % wp < w_out, acc, 0.0)   # mask horizontal-padding columns
    stats_ref[:, 0:1] = jnp.sum(y, axis=1, keepdims=True)
    stats_ref[:, 1:2] = jnp.sum(y * y, axis=1, keepdims=True)


def _conv_bn_act_kernel(x_ref, w_ref, s_ref, b_ref, o_ref, *,
                        kh, kw, wp, w_out, h_out, m_cols):
    """Pass 2: recompute the cheap conv, folded BN affine + LeakyReLU, store NCHW."""
    acc = _conv_image(x_ref, w_ref, kh=kh, kw=kw, wp=wp, m_cols=m_cols)
    z = acc * s_ref[...] + b_ref[...]            # per-channel scale/bias (broadcast)
    z = jnp.maximum(z, LEAKY_SLOPE * z)          # LeakyReLU(0.1)
    # Scatter valid columns (stride Wp) into the NCHW output block.  For
    # realistic widths (w_out a multiple of 128) each store is lane-dense.
    for h in range(h_out):
        o_ref[:, h, :] = z[:, h * wp:h * wp + w_out]


def cnn_block(x, conv_weight, bn_gamma, bn_beta, *, stride=1, padding=1):
    """x: (N, C_in, H, W) NCHW; conv_weight: (C_out, C_in, KH, KW). Returns NCHW f32."""
    n, c_in, h, w = x.shape
    c_out, c_in_w, kh, kw = conv_weight.shape
    assert c_in == c_in_w
    assert stride == 1, "this kernel supports stride=1"
    hp, wp = h + 2 * padding, w + 2 * padding
    h_out, w_out = hp - kh + 1, wp - kw + 1
    l_flat = hp * wp
    m_cols = (h_out - 1) * wp + w_out            # last needed conv column + 1

    # Layout prep (cheap XLA): keep NCHW, zero-pad spatially, bf16, flatten spatial.
    x_flat = jnp.pad(
        x.astype(jnp.bfloat16),
        ((0, 0), (0, 0), (padding, padding), (padding, padding)),
    ).reshape(n, c_in, l_flat)
    # (C_out, C_in, KH, KW) -> (KH*KW, C_out, C_in), bf16.
    w_taps = jnp.transpose(conv_weight, (2, 3, 0, 1)).reshape(
        kh * kw, c_out, c_in).astype(jnp.bfloat16)

    x_spec = pl.BlockSpec((None, c_in, l_flat), lambda i: (i, 0, 0))
    w_spec = pl.BlockSpec((kh * kw, c_out, c_in), lambda i: (0, 0, 0))
    cparams = pltpu.CompilerParams(dimension_semantics=("parallel",),
                                   vmem_limit_bytes=VMEM_LIMIT)

    # --- pass 1: per-image BN partial sums (sum, sum of squares) -------------
    stats = pl.pallas_call(
        functools.partial(_stats_kernel, kh=kh, kw=kw, wp=wp,
                          w_out=w_out, m_cols=m_cols),
        grid=(n,),
        in_specs=[x_spec, w_spec],
        out_specs=pl.BlockSpec((None, c_out, 2), lambda i: (i, 0, 0)),
        out_shape=jax.ShapeDtypeStruct((n, c_out, 2), jnp.float32),
        compiler_params=cparams,
    )(x_flat, w_taps)

    # --- tiny glue: fold training-mode BN into per-channel scale/bias (f32) --
    tot = jnp.sum(stats, axis=0)                 # (c_out, 2)
    count = float(n * h_out * w_out)
    mean = tot[:, 0] / count
    var = tot[:, 1] / count - mean * mean        # biased variance (BN forward)
    inv_std = jax.lax.rsqrt(var + BN_EPS)
    gamma = bn_gamma.astype(jnp.float32)
    beta = bn_beta.astype(jnp.float32)
    scale = (gamma * inv_std).reshape(c_out, 1)
    bias = (beta - mean * gamma * inv_std).reshape(c_out, 1)

    # --- pass 2: conv (recomputed) + folded BN + LeakyReLU, NCHW output ------
    out = pl.pallas_call(
        functools.partial(_conv_bn_act_kernel, kh=kh, kw=kw, wp=wp,
                          w_out=w_out, h_out=h_out, m_cols=m_cols),
        grid=(n,),
        in_specs=[x_spec, w_spec,
                  pl.BlockSpec((c_out, 1), lambda i: (0, 0)),
                  pl.BlockSpec((c_out, 1), lambda i: (0, 0))],
        out_specs=pl.BlockSpec((None, c_out, h_out, w_out), lambda i: (i, 0, 0, 0)),
        out_shape=jax.ShapeDtypeStruct((n, c_out, h_out, w_out), jnp.float32),
        compiler_params=cparams,
    )(x_flat, w_taps, scale, bias)
    # TODO(synk): emit bf16 here if the consumer accepts it (halves the final write).
    # TODO(synk): for large images add an H-strip grid axis so per-image blocks stay
    # within v7x's 64 MiB VMEM and both TensorCores get work when N is small.
    return out


if __name__ == "__main__":
    # Shapes consistent with CNNBlock(4, 8, kernel_size=3, stride=1, padding=1).
    N, C_IN, H, W = 2, 4, 16, 16
    C_OUT, KH, KW = 8, 3, 3

    key = jax.random.PRNGKey(0)
    kx, kwt = jax.random.split(key)
    x = jax.random.normal(kx, (N, C_IN, H, W), dtype=jnp.float32)
    fan_in = C_IN * KH * KW
    conv_weight = jax.random.normal(kwt, (C_OUT, C_IN, KH, KW), jnp.float32) * (
        (2.0 / fan_in) ** 0.5)
    bn_gamma = jnp.ones((C_OUT,), jnp.float32)   # BatchNorm2d default init
    bn_beta = jnp.zeros((C_OUT,), jnp.float32)

    out = cnn_block(x, conv_weight, bn_gamma, bn_beta, stride=1, padding=1)
    out = jax.block_until_ready(out)
    assert out.shape == (N, C_OUT, H, W), out.shape

    # Pure-JAX f32 reference of the module's forward (training-mode BN stats).
    ref_y = jax.lax.conv_general_dilated(
        x, conv_weight, window_strides=(1, 1), padding=((1, 1), (1, 1)),
        dimension_numbers=("NCHW", "OIHW", "NCHW"))
    r_mean = jnp.mean(ref_y, axis=(0, 2, 3), keepdims=True)
    r_var = jnp.mean((ref_y - r_mean) ** 2, axis=(0, 2, 3), keepdims=True)
    ref_z = (ref_y - r_mean) * jax.lax.rsqrt(r_var + BN_EPS)
    ref_z = ref_z * bn_gamma.reshape(1, -1, 1, 1) + bn_beta.reshape(1, -1, 1, 1)
    ref = jnp.where(ref_z > 0, ref_z, LEAKY_SLOPE * ref_z)

    err = jnp.max(jnp.abs(out - ref))
    assert jnp.isfinite(err) and err < 5e-2, f"max abs err {err}"
    print("KERNEL_OK")
</pallas_src>

<mosaic_0001>
module attributes {stable_mosaic.version = 11 : i64} {
  func.func @_stats_kernel(%arg0: i32, %arg1: memref<1x4x324xbf16, #tpu.memory_space<vmem>>, %arg2: memref<9x8x4xbf16, #tpu.memory_space<vmem>>, %arg3: memref<1x8x2xf32, #tpu.memory_space<vmem>>) attributes {dimension_semantics = [#tpu.dimension_semantics<parallel>], iteration_bounds = array<i64: 2>, scalar_prefetch = 0 : i64, scratch_operands = 0 : i64, tpu.core_type = #tpu.core_type<tc>, window_params = [{transform_indices = @transform_0, window_bounds = array<i64: 1, 4, 324>}, {pipeline_mode = #tpu.pipeline_mode<synchronous>, transform_indices = @transform_1, window_bounds = array<i64: 9, 8, 4>}, {transform_indices = @transform_2, window_bounds = array<i64: 1, 8, 2>}]} {
    %c0 = arith.constant 0 : index
    %c0_0 = arith.constant 0 : index
    %c0_1 = arith.constant 0 : index
    %0 = vector.load %arg1[%c0, %c0_0, %c0_1] : memref<1x4x324xbf16, #tpu.memory_space<vmem>>, vector<1x4x286xbf16>
    %1 = vector.shape_cast %0 : vector<1x4x286xbf16> to vector<4x286xbf16>
    %c0_2 = arith.constant 0 : index
    %c0_3 = arith.constant 0 : index
    %c0_4 = arith.constant 0 : index
    %2 = vector.load %arg2[%c0_2, %c0_3, %c0_4] : memref<9x8x4xbf16, #tpu.memory_space<vmem>>, vector<1x8x4xbf16>
    %3 = vector.shape_cast %2 : vector<1x8x4xbf16> to vector<8x4xbf16>
    %cst = arith.constant dense<0.000000e+00> : vector<8x286xf32>
    %4 = tpu.matmul %3, %1, %cst {dimension_numbers = #tpu.dot_dimension_numbers<[1], [0], [0], [1], [0, 0, 1, 1], [], []>} : vector<8x4xbf16>, vector<4x286xbf16>, vector<8x286xf32> -> vector<8x286xf32>
    %c0_5 = arith.constant 0 : index
    %c0_6 = arith.constant 0 : index
    %c1 = arith.constant 1 : index
    %5 = vector.load %arg1[%c0_5, %c0_6, %c1] : memref<1x4x324xbf16, #tpu.memory_space<vmem>>, vector<1x4x286xbf16>
    %6 = vector.shape_cast %5 : vector<1x4x286xbf16> to vector<4x286xbf16>
    %c1_7 = arith.constant 1 : index
    %c0_8 = arith.constant 0 : index
    %c0_9 = arith.constant 0 : index
    %7 = vector.load %arg2[%c1_7, %c0_8, %c0_9] : memref<9x8x4xbf16, #tpu.memory_space<vmem>>, vector<1x8x4xbf16>
    %8 = vector.shape_cast %7 : vector<1x8x4xbf16> to vector<8x4xbf16>
    %cst_10 = arith.constant dense<0.000000e+00> : vector<8x286xf32>
    %9 = tpu.matmul %8, %6, %cst_10 {dimension_numbers = #tpu.dot_dimension_numbers<[1], [0], [0], [1], [0, 0, 1, 1], [], []>} : vector<8x4xbf16>, vector<4x286xbf16>, vector<8x286xf32> -> vector<8x286xf32>
    %10 = arith.addf %4, %9 : vector<8x286xf32>
    %c0_11 = arith.constant 0 : index
    %c0_12 = arith.constant 0 : index
    %c2 = arith.constant 2 : index
    %11 = vector.load %arg1[%c0_11, %c0_12, %c2] : memref<1x4x324xbf16, #tpu.memory_space<vmem>>, vector<1x4x286xbf16>
    %12 = vector.shape_cast %11 : vector<1x4x286xbf16> to vector<4x286xbf16>
    %c2_13 = arith.constant 2 : index
    %c0_14 = arith.constant 0 : index
    %c0_15 = arith.constant 0 : index
    %13 = vector.load %arg2[%c2_13, %c0_14, %c0_15] : memref<9x8x4xbf16, #tpu.memory_space<vmem>>, vector<1x8x4xbf16>
    %14 = vector.shape_cast %13 : vector<1x8x4xbf16> to vector<8x4xbf16>
    %cst_16 = arith.constant dense<0.000000e+00> : vector<8x286xf32>
    %15 = tpu.matmul %14, %12, %cst_16 {dimension_numbers = #tpu.dot_dimension_numbers<[1], [0], [0], [1], [0, 0, 1, 1], [], []>} : vector<8x4xbf16>, vector<4x286xbf16>, vector<8x286xf32> -> vector<8x286xf32>
    %16 = arith.addf %10, %15 : vector<8x286xf32>
    %c0_17 = arith.constant 0 : index
    %c0_18 = arith.constant 0 : index
    %c18 = arith.constant 18 : index
    %17 = vector.load %arg1[%c0_17, %c0_18, %c18] : memref<1x4x324xbf16, #tpu.memory_space<vmem>>, vector<1x4x286xbf16>
    %18 = vector.shape_cast %17 : vector<1x4x286xbf16> to vector<4x286xbf16>
    %c3 = arith.constant 3 : index
    %c0_19 = arith.constant 0 : index
    %c0_20 = arith.constant 0 : index
    %19 = vector.load %arg2[%c3, %c0_19, %c0_20] : memref<9x8x4xbf16, #tpu.memory_space<vmem>>, vector<1x8x4xbf16>
    %20 = vector.shape_cast %19 : vector<1x8x4xbf16> to vector<8x4xbf16>
    %cst_21 = arith.constant dense<0.000000e+00> : vector<8x286xf32>
    %21 = tpu.matmul %20, %18, %cst_21 {dimension_numbers = #tpu.dot_dimension_numbers<[1], [0], [0], [1], [0, 0, 1, 1], [], []>} : vector<8x4xbf16>, vector<4x286xbf16>, vector<8x286xf32> -> vector<8x286xf32>
    %22 = arith.addf %16, %21 : vector<8x286xf32>
    %c0_22 = arith.constant 0 : index
    %c0_23 = arith.constant 0 : index
    %c19 = arith.constant 19 : index
    %23 = vector.load %arg1[%c0_22, %c0_23, %c19] : memref<1x4x324xbf16, #tpu.memory_space<vmem>>, vector<1x4x286xbf16>
    %24 = vector.shape_cast %23 : vector<1x4x286xbf16> to vector<4x286xbf16>
    %c4 = arith.constant 4 : index
    %c0_24 = arith.constant 0 : index
    %c0_25 = arith.constant 0 : index
    %25 = vector.load %arg2[%c4, %c0_24, %c0_25] : memref<9x8x4xbf16, #tpu.memory_space<vmem>>, vector<1x8x4xbf16>
    %26 = vector.shape_cast %25 : vector<1x8x4xbf16> to vector<8x4xbf16>
    %cst_26 = arith.constant dense<0.000000e+00> : vector<8x286xf32>
    %27 = tpu.matmul %26, %24, %cst_26 {dimension_numbers = #tpu.dot_dimension_numbers<[1], [0], [0], [1], [0, 0, 1, 1], [], []>} : vector<8x4xbf16>, vector<4x286xbf16>, vector<8x286xf32> -> vector<8x286xf32>
    %28 = arith.addf %22, %27 : vector<8x286xf32>
    %c0_27 = arith.constant 0 : index
    %c0_28 = arith.constant 0 : index
    %c20 = arith.constant 20 : index
    %29 = vector.load %arg1[%c0_27, %c0_28, %c20] : memref<1x4x324xbf16, #tpu.memory_space<vmem>>, vector<1x4x286xbf16>
    %30 = vector.shape_cast %29 : vector<1x4x286xbf16> to vector<4x286xbf16>
    %c5 = arith.constant 5 : index
    %c0_29 = arith.constant 0 : index
    %c0_30 = arith.constant 0 : index
    %31 = vector.load %arg2[%c5, %c0_29, %c0_30] : memref<9x8x4xbf16, #tpu.memory_space<vmem>>, vector<1x8x4xbf16>
    %32 = vector.shape_cast %31 : vector<1x8x4xbf16> to vector<8x4xbf16>
    %cst_31 = arith.constant dense<0.000000e+00> : vector<8x286xf32>
    %33 = tpu.matmul %32, %30, %cst_31 {dimension_numbers = #tpu.dot_dimension_numbers<[1], [0], [0], [1], [0, 0, 1, 1], [], []>} : vector<8x4xbf16>, vector<4x286xbf16>, vector<8x286xf32> -> vector<8x286xf32>
    %34 = arith.addf %28, %33 : vector<8x286xf32>
    %c0_32 = arith.constant 0 : index
    %c0_33 = arith.constant 0 : index
    %c36 = arith.constant 36 : index
    %35 = vector.load %arg1[%c0_32, %c0_33, %c36] : memref<1x4x324xbf16, #tpu.memory_space<vmem>>, vector<1x4x286xbf16>
    %36 = vector.shape_cast %35 : vector<1x4x286xbf16> to vector<4x286xbf16>
    %c6 = arith.constant 6 : index
    %c0_34 = arith.constant 0 : index
    %c0_35 = arith.constant 0 : index
    %37 = vector.load %arg2[%c6, %c0_34, %c0_35] : memref<9x8x4xbf16, #tpu.memory_space<vmem>>, vector<1x8x4xbf16>
    %38 = vector.shape_cast %37 : vector<1x8x4xbf16> to vector<8x4xbf16>
    %cst_36 = arith.constant dense<0.000000e+00> : vector<8x286xf32>
    %39 = tpu.matmul %38, %36, %cst_36 {dimension_numbers = #tpu.dot_dimension_numbers<[1], [0], [0], [1], [0, 0, 1, 1], [], []>} : vector<8x4xbf16>, vector<4x286xbf16>, vector<8x286xf32> -> vector<8x286xf32>
    %40 = arith.addf %34, %39 : vector<8x286xf32>
    %c0_37 = arith.constant 0 : index
    %c0_38 = arith.constant 0 : index
    %c37 = arith.constant 37 : index
    %41 = vector.load %arg1[%c0_37, %c0_38, %c37] : memref<1x4x324xbf16, #tpu.memory_space<vmem>>, vector<1x4x286xbf16>
    %42 = vector.shape_cast %41 : vector<1x4x286xbf16> to vector<4x286xbf16>
    %c7 = arith.constant 7 : index
    %c0_39 = arith.constant 0 : index
    %c0_40 = arith.constant 0 : index
    %43 = vector.load %arg2[%c7, %c0_39, %c0_40] : memref<9x8x4xbf16, #tpu.memory_space<vmem>>, vector<1x8x4xbf16>
    %44 = vector.shape_cast %43 : vector<1x8x4xbf16> to vector<8x4xbf16>
    %cst_41 = arith.constant dense<0.000000e+00> : vector<8x286xf32>
    %45 = tpu.matmul %44, %42, %cst_41 {dimension_numbers = #tpu.dot_dimension_numbers<[1], [0], [0], [1], [0, 0, 1, 1], [], []>} : vector<8x4xbf16>, vector<4x286xbf16>, vector<8x286xf32> -> vector<8x286xf32>
    %46 = arith.addf %40, %45 : vector<8x286xf32>
    %c0_42 = arith.constant 0 : index
    %c0_43 = arith.constant 0 : index
    %c38 = arith.constant 38 : index
    %47 = vector.load %arg1[%c0_42, %c0_43, %c38] : memref<1x4x324xbf16, #tpu.memory_space<vmem>>, vector<1x4x286xbf16>
    %48 = vector.shape_cast %47 : vector<1x4x286xbf16> to vector<4x286xbf16>
    %c8 = arith.constant 8 : index
    %c0_44 = arith.constant 0 : index
    %c0_45 = arith.constant 0 : index
    %49 = vector.load %arg2[%c8, %c0_44, %c0_45] : memref<9x8x4xbf16, #tpu.memory_space<vmem>>, vector<1x8x4xbf16>
    %50 = vector.shape_cast %49 : vector<1x8x4xbf16> to vector<8x4xbf16>
    %cst_46 = arith.constant dense<0.000000e+00> : vector<8x286xf32>
    %51 = tpu.matmul %50, %48, %cst_46 {dimension_numbers = #tpu.dot_dimension_numbers<[1], [0], [0], [1], [0, 0, 1, 1], [], []>} : vector<8x4xbf16>, vector<4x286xbf16>, vector<8x286xf32> -> vector<8x286xf32>
    %52 = arith.addf %46, %51 : vector<8x286xf32>
    %53 = tpu.iota {dimensions = array<i32: 1>} : vector<8x286xi32>
    %c18_i32 = arith.constant 18 : i32
    %c0_i32 = arith.constant 0 : i32
    %54 = arith.cmpi eq, %c18_i32, %c0_i32 : i32
    %c1_i32 = arith.constant 1 : i32
    %55 = arith.select %54, %c1_i32, %c18_i32 : i32
    %56 = vector.broadcast %55 : i32 to vector<8x286xi32>
    %57 = arith.remsi %53, %56 : vector<8x286xi32>
    %c0_i32_47 = arith.constant 0 : i32
    %58 = vector.broadcast %c0_i32_47 : i32 to vector<8x286xi32>
    %59 = arith.cmpi ne, %57, %58 : vector<8x286xi32>
    %c0_i32_48 = arith.constant 0 : i32
    %60 = vector.broadcast %c0_i32_48 : i32 to vector<8x286xi32>
    %61 = arith.cmpi slt, %57, %60 : vector<8x286xi32>
    %c0_i32_49 = arith.constant 0 : i32
    %62 = arith.cmpi slt, %55, %c0_i32_49 : i32
    %63 = vector.broadcast %62 : i1 to vector<8x286xi1>
    %64 = vector.broadcast %63 : vector<8x286xi1> to vector<8x286xi1>
    %65 = arith.xori %61, %64 : vector<8x286xi1>
    %66 = arith.andi %65, %59 : vector<8x286xi1>
    %67 = vector.broadcast %55 : i32 to vector<8x286xi32>
    %68 = arith.addi %57, %67 : vector<8x286xi32>
    %69 = arith.select %66, %68, %57 : vector<8x286xi1>, vector<8x286xi32>
    %c16_i32 = arith.constant 16 : i32
    %70 = vector.broadcast %c16_i32 : i32 to vector<8x286xi32>
    %71 = arith.cmpi slt, %69, %70 : vector<8x286xi32>
    %cst_50 = arith.constant 0.000000e+00 : f32
    %72 = vector.broadcast %cst_50 : f32 to vector<8x286xf32>
    %73 = arith.select %71, %52, %72 : vector<8x286xi1>, vector<8x286xf32>
    %cst_51 = arith.constant dense<0.000000e+00> : vector<8xf32>
    %74 = vector.multi_reduction <add>, %73, %cst_51 [1] : vector<8x286xf32> to vector<8xf32>
    %75 = vector.shape_cast %74 : vector<8xf32> to vector<8x1xf32>
    %c0_52 = arith.constant 0 : index
    %c0_53 = arith.constant 0 : index
    %c0_54 = arith.constant 0 : index
    %76 = vector.load %arg3[%c0_52, %c0_53, %c0_54] : memref<1x8x2xf32, #tpu.memory_space<vmem>>, vector<1x8x1xf32>
    %77 = vector.shape_cast %76 : vector<1x8x1xf32> to vector<8x1xf32>
    %78 = vector.shape_cast %75 : vector<8x1xf32> to vector<1x8x1xf32>
    tpu.vector_store %arg3[%c0_52, %c0_53, %c0_54], %78 {strides = array<i32>} : memref<1x8x2xf32, #tpu.memory_space<vmem>>, vector<1x8x1xf32>,
    %79 = arith.mulf %73, %73 : vector<8x286xf32>
    %cst_55 = arith.constant dense<0.000000e+00> : vector<8xf32>
    %80 = vector.multi_reduction <add>, %79, %cst_55 [1] : vector<8x286xf32> to vector<8xf32>
    %81 = vector.shape_cast %80 : vector<8xf32> to vector<8x1xf32>
    %c0_56 = arith.constant 0 : index
    %c0_57 = arith.constant 0 : index
    %c1_58 = arith.constant 1 : index
    %82 = vector.load %arg3[%c0_56, %c0_57, %c1_58] : memref<1x8x2xf32, #tpu.memory_space<vmem>>, vector<1x8x1xf32>
    %83 = vector.shape_cast %82 : vector<1x8x1xf32> to vector<8x1xf32>
    %84 = vector.shape_cast %81 : vector<8x1xf32> to vector<1x8x1xf32>
    tpu.vector_store %arg3[%c0_56, %c0_57, %c1_58], %84 {strides = array<i32>} : memref<1x8x2xf32, #tpu.memory_space<vmem>>, vector<1x8x1xf32>,
    return
  }
  func.func @transform_0(%arg0: i32) -> (i32, i32, i32) {
    %c0_i32 = arith.constant 0 : i32
    %c0_i32_0 = arith.constant 0 : i32
    %c0_i32_1 = arith.constant 0 : i32
    return %arg0, %c0_i32, %c0_i32_0 : i32, i32, i32
  }
  func.func @transform_1(%arg0: i32) -> (i32, i32, i32) {
    %c0_i32 = arith.constant 0 : i32
    %c0_i32_0 = arith.constant 0 : i32
    %c0_i32_1 = arith.constant 0 : i32
    %c0_i32_2 = arith.constant 0 : i32
    return %c0_i32, %c0_i32_0, %c0_i32_1 : i32, i32, i32
  }
  func.func @transform_2(%arg0: i32) -> (i32, i32, i32) {
    %c0_i32 = arith.constant 0 : i32
    %c0_i32_0 = arith.constant 0 : i32
    %c0_i32_1 = arith.constant 0 : i32
    return %arg0, %c0_i32, %c0_i32_0 : i32, i32, i32
  }
}

</mosaic_0001>

<llo_original>
// kernel: tpu_custom_call.1
$region0: #{tpu_custom_call.1}
  #allocation0 [shape = 'u32[]', space=smem, size = 0x4, offset = 0x4, fixed_abs, tag = 'smem constant byte address 0x4 - core index']
  #allocation1 [shape = 'u32[144,128]{1,0:T(1,128)}', space=vmem, size = 0x12000, scoped, tag = 'internal scratch']
  %s0 = inlined_call_operand.vmem [shape: bf16[2,4,324], index: 0, kind: input, shape index: {}]
  %s1 = inlined_call_operand.vmem [shape: bf16[9,8,4], index: 1, kind: input, shape index: {}]
  %s2 = inlined_call_operand.vmem [shape: f32[2,8,2], index: 2, kind: output, shape index: {}]
  %s3 = sld [smem:[#allocation0]]
  $region41: #{tpu_custom_call.1} parent=0
    _
  %s5 = ssub.s32 1, %s3
  %s6 = scalar_select 0, %s5, %s3
  loop: start=0, step=1, limit=4
  $region2: #{tpu_custom_call.1} parent=0 // loop_pre_header
    _
  $region3: #{tpu_custom_call.1} parent=0 // loop_header
    %s8 = sphi 0, %s12
    %p9 = scmp.ge.s32.totalorder %s8, 4
    %s18 = sphi 0, %s20
    %s21 = sphi 0, %s18
    %s22 = sphi 0, %s21
    %s38 = sphi 0, %s22
    %s42 = sphi 0, %s42
    %s44 = sphi 0, %s42
    %s45 = sphi 0, %s44
    %s59 = sphi 0, %s45
    %s65 = sphi 0, %s67
    %s68 = sphi 0, %s65
    %s69 = sphi 0, %s68
    %s85 = sphi 0, %s69
  $region4: #{tpu_custom_call.1} parent=0 // loop_header_branch
    %11 = sbr.rel (%p9) target = $region8
  $region5: #{tpu_custom_call.1} parent=0 // loop_body
    %s13 = ssub.s32 %s8, 1
    %s14 = ssub.s32 %s8, 2
    %s15 = sadd.s32 %s8, 1
    %s16 = ssub.s32 %s8, %s15
    %p17 = scmp.eq.s32.totalorder %s16, 0
    %s19 = sadd.s32 %s18, 1
    %s20 = scalar_select %p17, %s18, %s19
    %p23 = pneg %p17
    %p24 = scmp.eq.s32.totalorder %s8, 1
    %p25 = por %p23, %p24
    %p26 = scmp.ne.s32.totalorder %s18, %s21
    %p27 = scmp.eq.s32.totalorder %s8, 0
    %p28 = por %p26, %p27
    %p29 = scmp.ne.s32.totalorder %s18, %s21
    %p30 = scmp.eq.s32.totalorder %s13, 1
    %p31 = por %p29, %p30
    %p32 = scmp.ne.s32.totalorder %s21, %s22
    %p33 = scmp.eq.s32.totalorder %s13, 0
    %p34 = por %p32, %p33
    %p35 = scmp.ne.s32.totalorder %s21, %s22
    %p36 = scmp.eq.s32.totalorder %s14, 1
    %p37 = por %p35, %p36
    %p39 = scmp.ne.s32.totalorder %s22, %s38
    %p40 = scmp.eq.s32.totalorder %s14, 0
    %p41 = por %p39, %p40
    %s43 = sadd.s32 %s42, 1
    %p46 = scmp.eq.s32.totalorder %s8, 1
    %p47 = scmp.ne.s32.totalorder %s42, %s44
    %p48 = scmp.eq.s32.totalorder %s8, 0
    %p49 = por %p47, %p48
    %p50 = scmp.ne.s32.totalorder %s42, %s44
    %p51 = scmp.eq.s32.totalorder %s13, 1
    %p52 = por %p50, %p51
    %p53 = scmp.ne.s32.totalorder %s44, %s45
    %p54 = scmp.eq.s32.totalorder %s13, 0
    %p55 = por %p53, %p54
    %p56 = scmp.ne.s32.totalorder %s44, %s45
    %p57 = scmp.eq.s32.totalorder %s14, 1
    %p58 = por %p56, %p57
    %p60 = scmp.ne.s32.totalorder %s45, %s59
    %p61 = scmp.eq.s32.totalorder %s14, 0
    %p62 = por %p60, %p61
    %s63 = ssub.s32 %s8, %s15
    %p64 = scmp.eq.s32.totalorder %s63, 0
    %s66 = sadd.s32 %s65, 1
    %s67 = scalar_select %p64, %s65, %s66
    %p70 = pneg %p64
    %p71 = scmp.eq.s32.totalorder %s8, 1
    %p72 = por %p70, %p71
    %p73 = scmp.ne.s32.totalorder %s65, %s68
    %p74 = scmp.eq.s32.totalorder %s8, 0
    %p75 = por %p73, %p74
    %p76 = scmp.ne.s32.totalorder %s65, %s68
    %p77 = scmp.eq.s32.totalorder %s13, 1
    %p78 = por %p76, %p77
    %p79 = scmp.ne.s32.totalorder %s68, %s69
    %p80 = scmp.eq.s32.totalorder %s13, 0
    %p81 = por %p79, %p80
    %p82 = scmp.ne.s32.totalorder %s68, %s69
    %p83 = scmp.eq.s32.totalorder %s14, 1
    %p84 = por %p82, %p83
    %p86 = scmp.ne.s32.totalorder %s69, %s85
    %p87 = scmp.eq.s32.totalorder %s14, 0
    %p88 = por %p86, %p87
    %p89 = scmp.le.s32.totalorder 1, %s8
    %p90 = scmp.lt.s32.totalorder %s8, 3
    %p91 = pnand %p89, %p90
    %p92 = pneg %p91
    // Predicated region
    $region9: #{tpu_custom_call.1} parent=5 // pred_check
      _
    $region10: #{tpu_custom_call.1} parent=5 // pred_check_branch
      %94 = sbr.rel (%p91) target = $region12
    $region11: #{tpu_custom_call.1} parent=5 // pred_region
      %s95 = ssub.s32 %s8, 1
      // Predicated region
      $region13: #{tpu_custom_call.1} parent=11 // pred_check
        %p96 = pneg %p55
      $region14: #{tpu_custom_call.1} parent=11 // pred_check_branch
        %98 = sbr.rel (%p96) target = $region16
      $region15: #{tpu_custom_call.1} parent=11 // pred_region
        _
      $region16: #{tpu_custom_call.1} parent=11 // pred_fallthru
        _
    $region12: #{tpu_custom_call.1} parent=5 // pred_fallthru
      _
    %p99 = scmp.lt.s32.totalorder %s8, 2
    // Predicated region
    $region17: #{tpu_custom_call.1} parent=5 // pred_check
      %p100 = pneg %p99
    $region18: #{tpu_custom_call.1} parent=5 // pred_check_branch
      %102 = sbr.rel (%p100) target = $region20
    $region19: #{tpu_custom_call.1} parent=5 // pred_region
      // Predicated region
      $region21: #{tpu_custom_call.1} parent=19 // pred_check
        %p103 = pneg %p28
      $region22: #{tpu_custom_call.1} parent=19 // pred_check_branch
        %105 = sbr.rel (%p103) target = $region24
      $region23: #{tpu_custom_call.1} parent=19 // pred_region
        %p106 = scmp.lt.s32.totalorder %s8, 1
        %s107 = scalar_select %p106, %s8, 1
        %s108 = smul.addr %s107, 3
        %s109 = smul.addr %s108, 2
        %s110 = scalar_lea.vmem %s0, %s109
      $region24: #{tpu_custom_call.1} parent=19 // pred_fallthru
        _
    $region20: #{tpu_custom_call.1} parent=5 // pred_fallthru
      _
    %p111 = scmp.le.s32.totalorder 1, %s8
    %p112 = scmp.lt.s32.totalorder %s8, 3
    %p113 = pnand %p111, %p112
    %p114 = pneg %p113
    // Predicated region
    $region25: #{tpu_custom_call.1} parent=5 // pred_check
      _
    $region26: #{tpu_custom_call.1} parent=5 // pred_check_branch
      %116 = sbr.rel (%p113) target = $region28
    $region27: #{tpu_custom_call.1} parent=5 // pred_region
      %s117 = ssub.s32 %s8, 1
      %p118 = scmp.lt.s32.totalorder %s13, 1
      %s119 = scalar_select %p118, %s13, 1
      %s120 = smul.addr %s119, 3
      %s121 = smul.addr %s120, 2
      %s122 = scalar_lea.vmem %s0, %s121
      %p123 = pneg %p34
      %p124 = pneg %p31
      %p125 = pneg %p55
      %p126 = pneg %p52
      %p127 = pneg %p81
      %p128 = pneg %p78
      %p129 = scmp.lt.s32.totalorder %s13, 1
      %s130 = scalar_select %p129, %s13, 1
      %s131 = smul.addr %s130, 8
      %s132 = scalar_lea.vmem %s2, %s131
      %p133 = scmp.lt.s32.totalorder %s13, 1
      %s134 = scalar_select %p133, %s13, 1
      %s135 = smul.addr %s134, 3
      %s136 = smul.addr %s135, 2
      %s137 = scalar_lea.vmem %s0, %s136
      %p138 = scmp.lt.s32.totalorder %s13, 1
      %s139 = scalar_select %p138, %s13, 1
      %s140 = smul.addr %s139, 8
      %s141 = scalar_lea.vmem %s2, %s140
      %v143 = vld [vmem:[%s137] sm:$0x3f]
      %v144 = vld [vmem:[%s1] sm:$0xf]
      %s145 = scalar_lea.vmem %s1, 4
      %v146 = vld [vmem:[%s145] sm:$0xf]
      %v148 = vcombine.high %v143, %v143
      %v150 = vunpack.c.l.s4 1983009808
      %v151 = vunpack.c.0.s8 %v150
      %v152 = vlaneseq
      %v153 = vshrl.u32 %v152, 7
      %v154 = vsub.s32 %v151, %v153
      %v155 = vrot.slane %v143, %v154
      %v157 = vunpack.c.l.s4 1983009808
      %v158 = vunpack.c.0.s8 %v157
      %v159 = vlaneseq
      %v160 = vshrl.u32 %v159, 7
      %v161 = vsub.s32 %v158, %v160
      %v162 = vrot.slane %v148, %v161
      %v163 = vcombine.high %v155, %v155
      %164 = vrot.lane.b32.xlu0 %v155, 127
      %v165 = vpop.permute.xlu0 %164
      %166 = vrot.lane.b32.xlu0 %v163, 127
      %v167 = vpop.permute.xlu0 %166
      %168 = vrot.lane.b32.xlu0 %v162, 127
      %v169 = vpop.permute.xlu0 %168
      %vm170 = vcmask 1039360
      %v171 = vsel %vm170, %v165, %v167
      %v172 = vsel %vm170, %v167, %v169
      %vm173 = vcmask 31744
      %v175 = vsel %vm173, %v146, 0
      %vm177 = vcmask 1041408
      %v179 = vsel %vm177, %v171, 0
      %v182 = vsel %vm177, %v172, 0
      %v185 = vsel %vm177, %v169, 0
      %187 = vmatprep.subr.bf16.mxu0 %v182
      %188 = vmatpush1.bf16.msra.mxu0 %v179
      %189 = vmatprep.subr.bf16.mxu0 0
      %190 = vmatpush1.bf16.msra.mxu0 0
      %191 = vmatprep.subr.bf16.mxu0 0
      %192 = vmatpush1.bf16.msra.mxu0 0
      %193 = vmatprep.subr.bf16.mxu0 0
      %194 = vmatpush1.bf16.msra.mxu0 0
      %195 = vmatprep.subr.bf16.mxu0 0
      %196 = vmatpush1.bf16.msra.mxu0 0
      %197 = vmatprep.subr.bf16.mxu0 0
      %198 = vmatpush1.bf16.msra.mxu0 0
      %199 = vmatprep.subr.bf16.mxu0 0
      %200 = vmatpush1.bf16.msra.mxu0 0
      %201 = vmatprep.subr.bf16.mxu0 0
      %202 = vmatpush1.bf16.msra.mxu0 0
      %203 = vmatprep.subr.bf16.mxu0 0
      %204 = vmatpush1.bf16.msra.mxu0 0
      %205 = vmatprep.subr.bf16.mxu0 0
      %206 = vmatpush1.bf16.msra.mxu0 0
      %207 = vmatprep.subr.bf16.mxu0 0
      %208 = vmatpush1.bf16.msra.mxu0 0
      %209 = vmatprep.subr.bf16.mxu0 0
      %210 = vmatpush1.bf16.msra.mxu0 0
      %211 = vmatprep.subr.bf16.mxu0 0
      %212 = vmatpush1.bf16.msra.mxu0 0
      %213 = vmatprep.subr.bf16.mxu0 0
      %214 = vmatpush1.bf16.msra.mxu0 0
      %215 = vmatprep.subr.bf16.mxu0 0
      %216 = vmatpush1.bf16.msra.mxu0 0
      %217 = vmatprep.subr.bf16.mxu0 0
      %218 = vmatpush1.bf16.msra.mxu0 0
      %219 = vmatprep.mubr.bf16.mxu0 0
      %220 = vmatmul.mubr.bf16.gmra.mrb[0].mxu0 %v175
      %v221 = vpop.f32.mrb[0].mxu0
      %v222 = vadd.f32 0.0, %v221
      %v223 = vpop.f32.mrb[0].mxu0
      %v224 = vadd.f32 0.0, %v223
      %v225 = vpop.f32.mrb[0].mxu0
      %v226 = vpop.f32.mrb[0].mxu0
      %227 = vdwg.mxu0
      %228 = vmatprep.subr.bf16.mxu0 0
      %229 = vmatpush1.bf16.msra.mxu0 %v185
      %230 = vmatprep.subr.bf16.mxu0 0
      %231 = vmatpush1.bf16.msra.mxu0 0
      %232 = vmatprep.subr.bf16.mxu0 0
      %233 = vmatpush1.bf16.msra.mxu0 0
      %234 = vmatprep.subr.bf16.mxu0 0
      %235 = vmatpush1.bf16.msra.mxu0 0
      %236 = vmatprep.subr.bf16.mxu0 0
      %237 = vmatpush1.bf16.msra.mxu0 0
      %238 = vmatprep.subr.bf16.mxu0 0
      %239 = vmatpush1.bf16.msra.mxu0 0
      %240 = vmatprep.subr.bf16.mxu0 0
      %241 = vmatpush1.bf16.msra.mxu0 0
      %242 = vmatprep.subr.bf16.mxu0 0
      %243 = vmatpush1.bf16.msra.mxu0 0
      %244 = vmatprep.subr.bf16.mxu0 0
      %245 = vmatpush1.bf16.msra.mxu0 0
      %246 = vmatprep.subr.bf16.mxu0 0
      %247 = vmatpush1.bf16.msra.mxu0 0
      %248 = vmatprep.subr.bf16.mxu0 0
      %249 = vmatpush1.bf16.msra.mxu0 0
      %250 = vmatprep.subr.bf16.mxu0 0
      %251 = vmatpush1.bf16.msra.mxu0 0
      %252 = vmatprep.subr.bf16.mxu0 0
      %253 = vmatpush1.bf16.msra.mxu0 0
      %254 = vmatprep.subr.bf16.mxu0 0
      %255 = vmatpush1.bf16.msra.mxu0 0
      %256 = vmatprep.subr.bf16.mxu0 0
      %257 = vmatpush1.bf16.msra.mxu0 0
      %258 = vmatprep.subr.bf16.mxu0 0
      %259 = vmatpush1.bf16.msra.mxu0 0
      %260 = vmatprep.mubr.bf16.mxu0 0
      %261 = vmatmul.mubr.bf16.gmra.mrb[0].mxu0 %v175
      %v262 = vpop.f32.mrb[0].mxu0
      %v263 = vadd.f32 0.0, %v262
      %v264 = vpop.f32.mrb[0].mxu0
      %v265 = vpop.f32.mrb[0].mxu0
      %v266 = vpop.f32.mrb[0].mxu0
      %267 = vdwg.mxu0
      %v269 = vsel %vm173, %v144, 0
      %v272 = vsel %vm177, %v155, 0
      %v275 = vsel %vm177, %v163, 0
      %v278 = vsel %vm177, %v162, 0
      %280 = vmatprep.subr.bf16.mxu0 %v275
      %281 = vmatpush1.bf16.msra.mxu0 %v272
      %282 = vmatprep.subr.bf16.mxu0 0
      %283 = vmatpush1.bf16.msra.mxu0 0
      %284 = vmatprep.subr.bf16.mxu0 0
      %285 = vmatpush1.bf16.msra.mxu0 0
      %286 = vmatprep.subr.bf16.mxu0 0
      %287 = vmatpush1.bf16.msra.mxu0 0
      %288 = vmatprep.subr.bf16.mxu0 0
      %289 = vmatpush1.bf16.msra.mxu0 0
      %290 = vmatprep.subr.bf16.mxu0 0
      %291 = vmatpush1.bf16.msra.mxu0 0
      %292 = vmatprep.subr.bf16.mxu0 0
      %293 = vmatpush1.bf16.msra.mxu0 0
      %294 = vmatprep.subr.bf16.mxu0 0
      %295 = vmatpush1.bf16.msra.mxu0 0
      %296 = vmatprep.subr.bf16.mxu0 0
      %297 = vmatpush1.bf16.msra.mxu0 0
      %298 = vmatprep.subr.bf16.mxu0 0
      %299 = vmatpush1.bf16.msra.mxu0 0
      %300 = vmatprep.subr.bf16.mxu0 0
      %301 = vmatpush1.bf16.msra.mxu0 0
      %302 = vmatprep.subr.bf16.mxu0 0
      %303 = vmatpush1.bf16.msra.mxu0 0
      %304 = vmatprep.subr.bf16.mxu0 0
      %305 = vmatpush1.bf16.msra.mxu0 0
      %306 = vmatprep.subr.bf16.mxu0 0
      %307 = vmatpush1.bf16.msra.mxu0 0
      %308 = vmatprep.subr.bf16.mxu0 0
      %309 = vmatpush1.bf16.msra.mxu0 0
      %310 = vmatprep.subr.bf16.mxu0 0
      %311 = vmatpush1.bf16.msra.mxu0 0
      %312 = vmatprep.mubr.bf16.mxu0 0
      %313 = vmatmul.mubr.bf16.gmra.mrb[0].mxu0 %v269
      %v314 = vpop.f32.mrb[0].mxu0
      %v315 = vadd.f32 %v222, %v314
      %v316 = vpop.f32.mrb[0].mxu0
      %v317 = vadd.f32 %v224, %v316
      %v318 = vpop.f32.mrb[0].mxu0
      %v319 = vpop.f32.mrb[0].mxu0
      %320 = vdwg.mxu0
      %321 = vmatprep.subr.bf16.mxu0 0
      %322 = vmatpush1.bf16.msra.mxu0 %v278
      %323 = vmatprep.subr.bf16.mxu0 0
      %324 = vmatpush1.bf16.msra.mxu0 0
      %325 = vmatprep.subr.bf16.mxu0 0
      %326 = vmatpush1.bf16.msra.mxu0 0
      %327 = vmatprep.subr.bf16.mxu0 0
      %328 = vmatpush1.bf16.msra.mxu0 0
      %329 = vmatprep.subr.bf16.mxu0 0
      %330 = vmatpush1.bf16.msra.mxu0 0
      %331 = vmatprep.subr.bf16.mxu0 0
      %332 = vmatpush1.bf16.msra.mxu0 0
      %333 = vmatprep.subr.bf16.mxu0 0
      %334 = vmatpush1.bf16.msra.mxu0 0
      %335 = vmatprep.subr.bf16.mxu0 0
      %336 = vmatpush1.bf16.msra.mxu0 0
      %337 = vmatprep.subr.bf16.mxu0 0
      %338 = vmatpush1.bf16.msra.mxu0 0
      %339 = vmatprep.subr.bf16.mxu0 0
      %340 = vmatpush1.bf16.msra.mxu0 0
      %341 = vmatprep.subr.bf16.mxu0 0
      %342 = vmatpush1.bf16.msra.mxu0 0
      %343 = vmatprep.subr.bf16.mxu0 0
      %344 = vmatpush1.bf16.msra.mxu0 0
      %345 = vmatprep.subr.bf16.mxu0 0
      %346 = vmatpush1.bf16.msra.mxu0 0
      %347 = vmatprep.subr.bf16.mxu0 0
      %348 = vmatpush1.bf16.msra.mxu0 0
      %349 = vmatprep.subr.bf16.mxu0 0
      %350 = vmatpush1.bf16.msra.mxu0 0
      %351 = vmatprep.subr.bf16.mxu0 0
      %352 = vmatpush1.bf16.msra.mxu0 0
      %353 = vmatprep.mubr.bf16.mxu0 0
      %354 = vmatmul.mubr.bf16.gmra.mrb[0].mxu0 %v269
      %v355 = vpop.f32.mrb[0].mxu0
      %v356 = vadd.f32 %v263, %v355
      %v357 = vpop.f32.mrb[0].mxu0
      %v358 = vpop.f32.mrb[0].mxu0
      %v359 = vpop.f32.mrb[0].mxu0
      %360 = vdwg.mxu0
      %v361 = vld [vmem:[%s137] sm:$0x3f]
      %s362 = scalar_lea.vmem %s1, 8
      %v363 = vld [vmem:[%s362] sm:$0xf]
      %v365 = vcombine.high %v361, %v361
      %v367 = vunpack.c.l.s4 1983009808
      %v368 = vunpack.c.0.s8 %v367
      %v369 = vlaneseq
      %v370 = vshrl.u32 %v369, 7
      %v371 = vsub.s32 %v368, %v370
      %v372 = vrot.slane %v361, %v371
      %v374 = vunpack.c.l.s4 1983009808
      %v375 = vunpack.c.0.s8 %v374
      %v376 = vlaneseq
      %v377 = vshrl.u32 %v376, 7
      %v378 = vsub.s32 %v375, %v377
      %v379 = vrot.slane %v365, %v378
      %v380 = vcombine.high %v372, %v372
      %381 = vrot.lane.b32.xlu0 %v372, 126
      %v382 = vpop.permute.xlu0 %381
      %383 = vrot.lane.b32.xlu0 %v380, 126
      %v384 = vpop.permute.xlu0 %383
      %385 = vrot.lane.b32.xlu0 %v379, 126
      %v386 = vpop.permute.xlu0 %385
      %vm387 = vcmask 1031168
      %v388 = vsel %vm387, %v382, %v384
      %v389 = vsel %vm387, %v384, %v386
      %v391 = vsel %vm173, %v363, 0
      %v394 = vsel %vm177, %v388, 0
      %v397 = vsel %vm177, %v389, 0
      %v400 = vsel %vm177, %v386, 0
      %402 = vmatprep.subr.bf16.mxu0 %v397
      %403 = vmatpush1.bf16.msra.mxu0 %v394
      %404 = vmatprep.subr.bf16.mxu0 0
      %405 = vmatpush1.bf16.msra.mxu0 0
      %406 = vmatprep.subr.bf16.mxu0 0
      %407 = vmatpush1.bf16.msra.mxu0 0
      %408 = vmatprep.subr.bf16.mxu0 0
      %409 = vmatpush1.bf16.msra.mxu0 0
      %410 = vmatprep.subr.bf16.mxu0 0
      %411 = vmatpush1.bf16.msra.mxu0 0
      %412 = vmatprep.subr.bf16.mxu0 0
      %413 = vmatpush1.bf16.msra.mxu0 0
      %414 = vmatprep.subr.bf16.mxu0 0
      %415 = vmatpush1.bf16.msra.mxu0 0
      %416 = vmatprep.subr.bf16.mxu0 0
      %417 = vmatpush1.bf16.msra.mxu0 0
      %418 = vmatprep.subr.bf16.mxu0 0
      %419 = vmatpush1.bf16.msra.mxu0 0
      %420 = vmatprep.subr.bf16.mxu0 0
      %421 = vmatpush1.bf16.msra.mxu0 0
      %422 = vmatprep.subr.bf16.mxu0 0
      %423 = vmatpush1.bf16.msra.mxu0 0
      %424 = vmatprep.subr.bf16.mxu0 0
      %425 = vmatpush1.bf16.msra.mxu0 0
      %426 = vmatprep.subr.bf16.mxu0 0
      %427 = vmatpush1.bf16.msra.mxu0 0
      %428 = vmatprep.subr.bf16.mxu0 0
      %429 = vmatpush1.bf16.msra.mxu0 0
      %430 = vmatprep.subr.bf16.mxu0 0
      %431 = vmatpush1.bf16.msra.mxu0 0
      %432 = vmatprep.subr.bf16.mxu0 0
      %433 = vmatpush1.bf16.msra.mxu0 0
      %434 = vmatprep.mubr.bf16.mxu0 0
      %435 = vmatmul.mubr.bf16.gmra.mrb[0].mxu0 %v391
      %v436 = vpop.f32.mrb[0].mxu0
      %v437 = vadd.f32 0.0, %v436
      %v438 = vpop.f32.mrb[0].mxu0
      %v439 = vadd.f32 0.0, %v438
      %v440 = vpop.f32.mrb[0].mxu0
      %v441 = vpop.f32.mrb[0].mxu0
      %442 = vdwg.mxu0
      %443 = vmatprep.subr.bf16.mxu0 0
      %444 = vmatpush1.bf16.msra.mxu0 %v400
      %445 = vmatprep.subr.bf16.mxu0 0
      %446 = vmatpush1.bf16.msra.mxu0 0
      %447 = vmatprep.subr.bf16.mxu0 0
      %448 = vmatpush1.bf16.msra.mxu0 0
      %449 = vmatprep.subr.bf16.mxu0 0
      %450 = vmatpush1.bf16.msra.mxu0 0
      %451 = vmatprep.subr.bf16.mxu0 0
      %452 = vmatpush1.bf16.msra.mxu0 0
      %453 = vmatprep.subr.bf16.mxu0 0
      %454 = vmatpush1.bf16.msra.mxu0 0
      %455 = vmatprep.subr.bf16.mxu0 0
      %456 = vmatpush1.bf16.msra.mxu0 0
      %457 = vmatprep.subr.bf16.mxu0 0
      %458 = vmatpush1.bf16.msra.mxu0 0
      %459 = vmatprep.subr.bf16.mxu0 0
      %460 = vmatpush1.bf16.msra.mxu0 0
      %461 = vmatprep.subr.bf16.mxu0 0
      %462 = vmatpush1.bf16.msra.mxu0 0
      %463 = vmatprep.subr.bf16.mxu0 0
      %464 = vmatpush1.bf16.msra.mxu0 0
      %465 = vmatprep.subr.bf16.mxu0 0
      %466 = vmatpush1.bf16.msra.mxu0 0
      %467 = vmatprep.subr.bf16.mxu0 0
      %468 = vmatpush1.bf16.msra.mxu0 0
      %469 = vmatprep.subr.bf16.mxu0 0
      %470 = vmatpush1.bf16.msra.mxu0 0
      %471 = vmatprep.subr.bf16.mxu0 0
      %472 = vmatpush1.bf16.msra.mxu0 0
      %473 = vmatprep.subr.bf16.mxu0 0
      %474 = vmatpush1.bf16.msra.mxu0 0
      %475 = vmatprep.mubr.bf16.mxu0 0
      %476 = vmatmul.mubr.bf16.gmra.mrb[0].mxu0 %v391
      %v477 = vpop.f32.mrb[0].mxu0
      %v478 = vadd.f32 0.0, %v477
      %v479 = vpop.f32.mrb[0].mxu0
      %v480 = vpop.f32.mrb[0].mxu0
      %v481 = vpop.f32.mrb[0].mxu0
      %482 = vdwg.mxu0
      %v483 = vadd.f32 %v315, %v437
      %v484 = vadd.f32 %v317, %v439
      %v485 = vadd.f32 %v356, %v478
      %v486 = vld [vmem:[%s137] sm:$0x3f]
      %s487 = scalar_lea.vmem %s1, 12
      %v488 = vld [vmem:[%s487] sm:$0xf]
      %v490 = vcombine.high %v486, %v486
      %v492 = vunpack.c.l.s4 1983009808
      %v493 = vunpack.c.0.s8 %v492
      %v494 = vlaneseq
      %v495 = vshrl.u32 %v494, 7
      %v496 = vsub.s32 %v493, %v495
      %v497 = vrot.slane %v486, %v496
      %v499 = vunpack.c.l.s4 1983009808
      %v500 = vunpack.c.0.s8 %v499
      %v501 = vlaneseq
      %v502 = vshrl.u32 %v501, 7
      %v503 = vsub.s32 %v500, %v502
      %v504 = vrot.slane %v490, %v503
      %v505 = vcombine.high %v497, %v497
      %506 = vrot.lane.b32.xlu0 %v497, 110
      %v507 = vpop.permute.xlu0 %506
      %508 = vrot.lane.b32.xlu0 %v505, 110
      %v509 = vpop.permute.xlu0 %508
      %510 = vrot.lane.b32.xlu0 %v504, 110
      %v511 = vpop.permute.xlu0 %510
      %vm512 = vcmask 900096
      %v513 = vsel %vm512, %v507, %v509
      %v514 = vsel %vm512, %v509, %v511
      %v516 = vsel %vm173, %v488, 0
      %v519 = vsel %vm177, %v513, 0
      %v522 = vsel %vm177, %v514, 0
      %v525 = vsel %vm177, %v511, 0
      %527 = vmatprep.subr.bf16.mxu0 %v522
      %528 = vmatpush1.bf16.msra.mxu0 %v519
      %529 = vmatprep.subr.bf16.mxu0 0
      %530 = vmatpush1.bf16.msra.mxu0 0
      %531 = vmatprep.subr.bf16.mxu0 0
      %532 = vmatpush1.bf16.msra.mxu0 0
      %533 = vmatprep.subr.bf16.mxu0 0
      %534 = vmatpush1.bf16.msra.mxu0 0
      %535 = vmatprep.subr.bf16.mxu0 0
      %536 = vmatpush1.bf16.msra.mxu0 0
      %537 = vmatprep.subr.bf16.mxu0 0
      %538 = vmatpush1.bf16.msra.mxu0 0
      %539 = vmatprep.subr.bf16.mxu0 0
      %540 = vmatpush1.bf16.msra.mxu0 0
      %541 = vmatprep.subr.bf16.mxu0 0
      %542 = vmatpush1.bf16.msra.mxu0 0
      %543 = vmatprep.subr.bf16.mxu0 0
      %544 = vmatpush1.bf16.msra.mxu0 0
      %545 = vmatprep.subr.bf16.mxu0 0
      %546 = vmatpush1.bf16.msra.mxu0 0
      %547 = vmatprep.subr.bf16.mxu0 0
      %548 = vmatpush1.bf16.msra.mxu0 0
      %549 = vmatprep.subr.bf16.mxu0 0
      %550 = vmatpush1.bf16.msra.mxu0 0
      %551 = vmatprep.subr.bf16.mxu0 0
      %552 = vmatpush1.bf16.msra.mxu0 0
      %553 = vmatprep.subr.bf16.mxu0 0
      %554 = vmatpush1.bf16.msra.mxu0 0
      %555 = vmatprep.subr.bf16.mxu0 0
      %556 = vmatpush1.bf16.msra.mxu0 0
      %557 = vmatprep.subr.bf16.mxu0 0
      %558 = vmatpush1.bf16.msra.mxu0 0
      %559 = vmatprep.mubr.bf16.mxu0 0
      %560 = vmatmul.mubr.bf16.gmra.mrb[0].mxu0 %v516
      %v561 = vpop.f32.mrb[0].mxu0
      %v562 = vadd.f32 0.0, %v561
      %v563 = vpop.f32.mrb[0].mxu0
      %v564 = vadd.f32 0.0, %v563
      %v565 = vpop.f32.mrb[0].mxu0
      %v566 = vpop.f32.mrb[0].mxu0
      %567 = vdwg.mxu0
      %568 = vmatprep.subr.bf16.mxu0 0
      %569 = vmatpush1.bf16.msra.mxu0 %v525
      %570 = vmatprep.subr.bf16.mxu0 0
      %571 = vmatpush1.bf16.msra.mxu0 0
      %572 = vmatprep.subr.bf16.mxu0 0
      %573 = vmatpush1.bf16.msra.mxu0 0
      %574 = vmatprep.subr.bf16.mxu0 0
      %575 = vmatpush1.bf16.msra.mxu0 0
      %576 = vmatprep.subr.bf16.mxu0 0
      %577 = vmatpush1.bf16.msra.mxu0 0
      %578 = vmatprep.subr.bf16.mxu0 0
      %579 = vmatpush1.bf16.msra.mxu0 0
      %580 = vmatprep.subr.bf16.mxu0 0
      %581 = vmatpush1.bf16.msra.mxu0 0
      %582 = vmatprep.subr.bf16.mxu0 0
      %583 = vmatpush1.bf16.msra.mxu0 0
      %584 = vmatprep.subr.bf16.mxu0 0
      %585 = vmatpush1.bf16.msra.mxu0 0
      %586 = vmatprep.subr.bf16.mxu0 0
      %587 = vmatpush1.bf16.msra.mxu0 0
      %588 = vmatprep.subr.bf16.mxu0 0
      %589 = vmatpush1.bf16.msra.mxu0 0
      %590 = vmatprep.subr.bf16.mxu0 0
      %591 = vmatpush1.bf16.msra.mxu0 0
      %592 = vmatprep.subr.bf16.mxu0 0
      %593 = vmatpush1.bf16.msra.mxu0 0
      %594 = vmatprep.subr.bf16.mxu0 0
      %595 = vmatpush1.bf16.msra.mxu0 0
      %596 = vmatprep.subr.bf16.mxu0 0
      %597 = vmatpush1.bf16.msra.mxu0 0
      %598 = vmatprep.subr.bf16.mxu0 0
      %599 = vmatpush1.bf16.msra.mxu0 0
      %600 = vmatprep.mubr.bf16.mxu0 0
      %601 = vmatmul.mubr.bf16.gmra.mrb[0].mxu0 %v516
      %v602 = vpop.f32.mrb[0].mxu0
      %v603 = vadd.f32 0.0, %v602
      %v604 = vpop.f32.mrb[0].mxu0
      %v605 = vpop.f32.mrb[0].mxu0
      %v606 = vpop.f32.mrb[0].mxu0
      %607 = vdwg.mxu0
      %v608 = vadd.f32 %v483, %v562
      %v609 = vadd.f32 %v484, %v564
      %v610 = vadd.f32 %v485, %v603
      %v611 = vld [vmem:[%s137] sm:$0x3f]
      %s612 = scalar_lea.vmem %s1, 16
      %v613 = vld [vmem:[%s612] sm:$0xf]
      %v615 = vcombine.high %v611, %v611
      %v617 = vunpack.c.l.s4 1983009808
      %v618 = vunpack.c.0.s8 %v617
      %v619 = vlaneseq
      %v620 = vshrl.u32 %v619, 7
      %v621 = vsub.s32 %v618, %v620
      %v622 = vrot.slane %v611, %v621
      %v624 = vunpack.c.l.s4 1983009808
      %v625 = vunpack.c.0.s8 %v624
      %v626 = vlaneseq
      %v627 = vshrl.u32 %v626, 7
      %v628 = vsub.s32 %v625, %v627
      %v629 = vrot.slane %v615, %v628
      %v630 = vcombine.high %v622, %v622
      %631 = vrot.lane.b32.xlu0 %v622, 109
      %v632 = vpop.permute.xlu0 %631
      %633 = vrot.lane.b32.xlu0 %v630, 109
      %v634 = vpop.permute.xlu0 %633
      %635 = vrot.lane.b32.xlu0 %v629, 109
      %v636 = vpop.permute.xlu0 %635
      %vm637 = vcmask 891904
      %v638 = vsel %vm637, %v632, %v634
      %v639 = vsel %vm637, %v634, %v636
      %v641 = vsel %vm173, %v613, 0
      %v644 = vsel %vm177, %v638, 0
      %v647 = vsel %vm177, %v639, 0
      %v650 = vsel %vm177, %v636, 0
      %652 = vmatprep.subr.bf16.mxu0 %v647
      %653 = vmatpush1.bf16.msra.mxu0 %v644
      %654 = vmatprep.subr.bf16.mxu0 0
      %655 = vmatpush1.bf16.msra.mxu0 0
      %656 = vmatprep.subr.bf16.mxu0 0
      %657 = vmatpush1.bf16.msra.mxu0 0
      %658 = vmatprep.subr.bf16.mxu0 0
      %659 = vmatpush1.bf16.msra.mxu0 0
      %660 = vmatprep.subr.bf16.mxu0 0
      %661 = vmatpush1.bf16.msra.mxu0 0
      %662 = vmatprep.subr.bf16.mxu0 0
      %663 = vmatpush1.bf16.msra.mxu0 0
      %664 = vmatprep.subr.bf16.mxu0 0
      %665 = vmatpush1.bf16.msra.mxu0 0
      %666 = vmatprep.subr.bf16.mxu0 0
      %667 = vmatpush1.bf16.msra.mxu0 0
      %668 = vmatprep.subr.bf16.mxu0 0
      %669 = vmatpush1.bf16.msra.mxu0 0
      %670 = vmatprep.subr.bf16.mxu0 0
      %671 = vmatpush1.bf16.msra.mxu0 0
      %672 = vmatprep.subr.bf16.mxu0 0
      %673 = vmatpush1.bf16.msra.mxu0 0
      %674 = vmatprep.subr.bf16.mxu0 0
      %675 = vmatpush1.bf16.msra.mxu0 0
      %676 = vmatprep.subr.bf16.mxu0 0
      %677 = vmatpush1.bf16.msra.mxu0 0
      %678 = vmatprep.subr.bf16.mxu0 0
      %679 = vmatpush1.bf16.msra.mxu0 0
      %680 = vmatprep.subr.bf16.mxu0 0
      %681 = vmatpush1.bf16.msra.mxu0 0
      %682 = vmatprep.subr.bf16.mxu0 0
      %683 = vmatpush1.bf16.msra.mxu0 0
      %684 = vmatprep.mubr.bf16.mxu0 0
      %685 = vmatmul.mubr.bf16.gmra.mrb[0].mxu0 %v641
      %v686 = vpop.f32.mrb[0].mxu0
      %v687 = vadd.f32 0.0, %v686
      %v688 = vpop.f32.mrb[0].mxu0
      %v689 = vadd.f32 0.0, %v688
      %v690 = vpop.f32.mrb[0].mxu0
      %v691 = vpop.f32.mrb[0].mxu0
      %692 = vdwg.mxu0
      %693 = vmatprep.subr.bf16.mxu0 0
      %694 = vmatpush1.bf16.msra.mxu0 %v650
      %695 = vmatprep.subr.bf16.mxu0 0
      %696 = vmatpush1.bf16.msra.mxu0 0
      %697 = vmatprep.subr.bf16.mxu0 0
      %698 = vmatpush1.bf16.msra.mxu0 0
      %699 = vmatprep.subr.bf16.mxu0 0
      %700 = vmatpush1.bf16.msra.mxu0 0
      %701 = vmatprep.subr.bf16.mxu0 0
      %702 = vmatpush1.bf16.msra.mxu0 0
      %703 = vmatprep.subr.bf16.mxu0 0
      %704 = vmatpush1.bf16.msra.mxu0 0
      %705 = vmatprep.subr.bf16.mxu0 0
      %706 = vmatpush1.bf16.msra.mxu0 0
      %707 = vmatprep.subr.bf16.mxu0 0
      %708 = vmatpush1.bf16.msra.mxu0 0
      %709 = vmatprep.subr.bf16.mxu0 0
      %710 = vmatpush1.bf16.msra.mxu0 0
      %711 = vmatprep.subr.bf16.mxu0 0
      %712 = vmatpush1.bf16.msra.mxu0 0
      %713 = vmatprep.subr.bf16.mxu0 0
      %714 = vmatpush1.bf16.msra.mxu0 0
      %715 = vmatprep.subr.bf16.mxu0 0
      %716 = vmatpush1.bf16.msra.mxu0 0
      %717 = vmatprep.subr.bf16.mxu0 0
      %718 = vmatpush1.bf16.msra.mxu0 0
      %719 = vmatprep.subr.bf16.mxu0 0
      %720 = vmatpush1.bf16.msra.mxu0 0
      %721 = vmatprep.subr.bf16.mxu0 0
      %722 = vmatpush1.bf16.msra.mxu0 0
      %723 = vmatprep.subr.bf16.mxu0 0
      %724 = vmatpush1.bf16.msra.mxu0 0
      %725 = vmatprep.mubr.bf16.mxu0 0
      %726 = vmatmul.mubr.bf16.gmra.mrb[0].mxu0 %v641
      %v727 = vpop.f32.mrb[0].mxu0
      %v728 = vadd.f32 0.0, %v727
      %v729 = vpop.f32.mrb[0].mxu0
      %v730 = vpop.f32.mrb[0].mxu0
      %v731 = vpop.f32.mrb[0].mxu0
      %732 = vdwg.mxu0
      %v733 = vadd.f32 %v608, %v687
      %v734 = vadd.f32 %v609, %v689
      %v735 = vadd.f32 %v610, %v728
      %v736 = vld [vmem:[%s137] sm:$0x3f]
      %s737 = scalar_lea.vmem %s1, 20
      %v738 = vld [vmem:[%s737] sm:$0xf]
      %v740 = vcombine.high %v736, %v736
      %v742 = vunpack.c.l.s4 1983009808
      %v743 = vunpack.c.0.s8 %v742
      %v744 = vlaneseq
      %v745 = vshrl.u32 %v744, 7
      %v746 = vsub.s32 %v743, %v745
      %v747 = vrot.slane %v736, %v746
      %v749 = vunpack.c.l.s4 1983009808
      %v750 = vunpack.c.0.s8 %v749
      %v751 = vlaneseq
      %v752 = vshrl.u32 %v751, 7
      %v753 = vsub.s32 %v750, %v752
      %v754 = vrot.slane %v740, %v753
      %v755 = vcombine.high %v747, %v747
      %756 = vrot.lane.b32.xlu0 %v747, 108
      %v757 = vpop.permute.xlu0 %756
      %758 = vrot.lane.b32.xlu0 %v755, 108
      %v759 = vpop.permute.xlu0 %758
      %760 = vrot.lane.b32.xlu0 %v754, 108
      %v761 = vpop.permute.xlu0 %760
      %vm762 = vcmask 883712
      %v763 = vsel %vm762, %v757, %v759
      %v764 = vsel %vm762, %v759, %v761
      %v766 = vsel %vm173, %v738, 0
      %v769 = vsel %vm177, %v763, 0
      %v772 = vsel %vm177, %v764, 0
      %v775 = vsel %vm177, %v761, 0
      %777 = vmatprep.subr.bf16.mxu0 %v772
      %778 = vmatpush1.bf16.msra.mxu0 %v769
      %779 = vmatprep.subr.bf16.mxu0 0
      %780 = vmatpush1.bf16.msra.mxu0 0
      %781 = vmatprep.subr.bf16.mxu0 0
      %782 = vmatpush1.bf16.msra.mxu0 0
      %783 = vmatprep.subr.bf16.mxu0 0
      %784 = vmatpush1.bf16.msra.mxu0 0
      %785 = vmatprep.subr.bf16.mxu0 0
      %786 = vmatpush1.bf16.msra.mxu0 0
      %787 = vmatprep.subr.bf16.mxu0 0
      %788 = vmatpush1.bf16.msra.mxu0 0
      %789 = vmatprep.subr.bf16.mxu0 0
      %790 = vmatpush1.bf16.msra.mxu0 0
      %791 = vmatprep.subr.bf16.mxu0 0
      %792 = vmatpush1.bf16.msra.mxu0 0
      %793 = vmatprep.subr.bf16.mxu0 0
      %794 = vmatpush1.bf16.msra.mxu0 0
      %795 = vmatprep.subr.bf16.mxu0 0
      %796 = vmatpush1.bf16.msra.mxu0 0
      %797 = vmatprep.subr.bf16.mxu0 0
      %798 = vmatpush1.bf16.msra.mxu0 0
      %799 = vmatprep.subr.bf16.mxu0 0
      %800 = vmatpush1.bf16.msra.mxu0 0
      %801 = vmatprep.subr.bf16.mxu0 0
      %802 = vmatpush1.bf16.msra.mxu0 0
      %803 = vmatprep.subr.bf16.mxu0 0
      %804 = vmatpush1.bf16.msra.mxu0 0
      %805 = vmatprep.subr.bf16.mxu0 0
      %806 = vmatpush1.bf16.msra.mxu0 0
      %807 = vmatprep.subr.bf16.mxu0 0
      %808 = vmatpush1.bf16.msra.mxu0 0
      %809 = vmatprep.mubr.bf16.mxu0 0
      %810 = vmatmul.mubr.bf16.gmra.mrb[0].mxu0 %v766
      %v811 = vpop.f32.mrb[0].mxu0
      %v812 = vadd.f32 0.0, %v811
      %v813 = vpop.f32.mrb[0].mxu0
      %v814 = vadd.f32 0.0, %v813
      %v815 = vpop.f32.mrb[0].mxu0
      %v816 = vpop.f32.mrb[0].mxu0
      %817 = vdwg.mxu0
      %818 = vmatprep.subr.bf16.mxu0 0
      %819 = vmatpush1.bf16.msra.mxu0 %v775
      %820 = vmatprep.subr.bf16.mxu0 0
      %821 = vmatpush1.bf16.msra.mxu0 0
      %822 = vmatprep.subr.bf16.mxu0 0
      %823 = vmatpush1.bf16.msra.mxu0 0
      %824 = vmatprep.subr.bf16.mxu0 0
      %825 = vmatpush1.bf16.msra.mxu0 0
      %826 = vmatprep.subr.bf16.mxu0 0
      %827 = vmatpush1.bf16.msra.mxu0 0
      %828 = vmatprep.subr.bf16.mxu0 0
      %829 = vmatpush1.bf16.msra.mxu0 0
      %830 = vmatprep.subr.bf16.mxu0 0
      %831 = vmatpush1.bf16.msra.mxu0 0
      %832 = vmatprep.subr.bf16.mxu0 0
      %833 = vmatpush1.bf16.msra.mxu0 0
      %834 = vmatprep.subr.bf16.mxu0 0
      %835 = vmatpush1.bf16.msra.mxu0 0
      %836 = vmatprep.subr.bf16.mxu0 0
      %837 = vmatpush1.bf16.msra.mxu0 0
      %838 = vmatprep.subr.bf16.mxu0 0
      %839 = vmatpush1.bf16.msra.mxu0 0
      %840 = vmatprep.subr.bf16.mxu0 0
      %841 = vmatpush1.bf16.msra.mxu0 0
      %842 = vmatprep.subr.bf16.mxu0 0
      %843 = vmatpush1.bf16.msra.mxu0 0
      %844 = vmatprep.subr.bf16.mxu0 0
      %845 = vmatpush1.bf16.msra.mxu0 0
      %846 = vmatprep.subr.bf16.mxu0 0
      %847 = vmatpush1.bf16.msra.mxu0 0
      %848 = vmatprep.subr.bf16.mxu0 0
      %849 = vmatpush1.bf16.msra.mxu0 0
      %850 = vmatprep.mubr.bf16.mxu0 0
      %851 = vmatmul.mubr.bf16.gmra.mrb[0].mxu0 %v766
      %v852 = vpop.f32.mrb[0].mxu0
      %v853 = vadd.f32 0.0, %v852
      %v854 = vpop.f32.mrb[0].mxu0
      %v855 = vpop.f32.mrb[0].mxu0
      %v856 = vpop.f32.mrb[0].mxu0
      %857 = vdwg.mxu0
      %v858 = vadd.f32 %v733, %v812
      %v859 = vadd.f32 %v734, %v814
      %v860 = vadd.f32 %v735, %v853
      %v861 = vld [vmem:[%s137] sm:$0x3f]
      %s862 = scalar_lea.vmem %s1, 24
      %v863 = vld [vmem:[%s862] sm:$0xf]
      %v865 = vcombine.high %v861, %v861
      %v867 = vunpack.c.l.s4 1983009808
      %v868 = vunpack.c.0.s8 %v867
      %v869 = vlaneseq
      %v870 = vshrl.u32 %v869, 7
      %v871 = vsub.s32 %v868, %v870
      %v872 = vrot.slane %v861, %v871
      %v874 = vunpack.c.l.s4 1983009808
      %v875 = vunpack.c.0.s8 %v874
      %v876 = vlaneseq
      %v877 = vshrl.u32 %v876, 7
      %v878 = vsub.s32 %v875, %v877
      %v879 = vrot.slane %v865, %v878
      %v880 = vcombine.high %v872, %v872
      %881 = vrot.lane.b32.xlu0 %v872, 92
      %v882 = vpop.permute.xlu0 %881
      %883 = vrot.lane.b32.xlu0 %v880, 92
      %v884 = vpop.permute.xlu0 %883
      %885 = vrot.lane.b32.xlu0 %v879, 92
      %v886 = vpop.permute.xlu0 %885
      %vm887 = vcmask 752640
      %v888 = vsel %vm887, %v882, %v884
      %v889 = vsel %vm887, %v884, %v886
      %v891 = vsel %vm173, %v863, 0
      %v894 = vsel %vm177, %v888, 0
      %v897 = vsel %vm177, %v889, 0
      %v900 = vsel %vm177, %v886, 0
      %902 = vmatprep.subr.bf16.mxu0 %v897
      %903 = vmatpush1.bf16.msra.mxu0 %v894
      %904 = vmatprep.subr.bf16.mxu0 0
      %905 = vmatpush1.bf16.msra.mxu0 0
      %906 = vmatprep.subr.bf16.mxu0 0
      %907 = vmatpush1.bf16.msra.mxu0 0
      %908 = vmatprep.subr.bf16.mxu0 0
      %909 = vmatpush1.bf16.msra.mxu0 0
      %910 = vmatprep.subr.bf16.mxu0 0
      %911 = vmatpush1.bf16.msra.mxu0 0
      %912 = vmatprep.subr.bf16.mxu0 0
      %913 = vmatpush1.bf16.msra.mxu0 0
      %914 = vmatprep.subr.bf16.mxu0 0
      %915 = vmatpush1.bf16.msra.mxu0 0
      %916 = vmatprep.subr.bf16.mxu0 0
      %917 = vmatpush1.bf16.msra.mxu0 0
      %918 = vmatprep.subr.bf16.mxu0 0
      %919 = vmatpush1.bf16.msra.mxu0 0
      %920 = vmatprep.subr.bf16.mxu0 0
      %921 = vmatpush1.bf16.msra.mxu0 0
      %922 = vmatprep.subr.bf16.mxu0 0
      %923 = vmatpush1.bf16.msra.mxu0 0
      %924 = vmatprep.subr.bf16.mxu0 0
      %925 = vmatpush1.bf16.msra.mxu0 0
      %926 = vmatprep.subr.bf16.mxu0 0
      %927 = vmatpush1.bf16.msra.mxu0 0
      %928 = vmatprep.subr.bf16.mxu0 0
      %929 = vmatpush1.bf16.msra.mxu0 0
      %930 = vmatprep.subr.bf16.mxu0 0
      %931 = vmatpush1.bf16.msra.mxu0 0
      %932 = vmatprep.subr.bf16.mxu0 0
      %933 = vmatpush1.bf16.msra.mxu0 0
      %934 = vmatprep.mubr.bf16.mxu0 0
      %935 = vmatmul.mubr.bf16.gmra.mrb[0].mxu0 %v891
      %v936 = vpop.f32.mrb[0].mxu0
      %v937 = vadd.f32 0.0, %v936
      %v938 = vpop.f32.mrb[0].mxu0
      %v939 = vadd.f32 0.0, %v938
      %v940 = vpop.f32.mrb[0].mxu0
      %v941 = vpop.f32.mrb[0].mxu0
      %942 = vdwg.mxu0
      %943 = vmatprep.subr.bf16.mxu0 0
      %944 = vmatpush1.bf16.msra.mxu0 %v900
      %945 = vmatprep.subr.bf16.mxu0 0
      %946 = vmatpush1.bf16.msra.mxu0 0
      %947 = vmatprep.subr.bf16.mxu0 0
      %948 = vmatpush1.bf16.msra.mxu0 0
      %949 = vmatprep.subr.bf16.mxu0 0
      %950 = vmatpush1.bf16.msra.mxu0 0
      %951 = vmatprep.subr.bf16.mxu0 0
      %952 = vmatpush1.bf16.msra.mxu0 0
      %953 = vmatprep.subr.bf16.mxu0 0
      %954 = vmatpush1.bf16.msra.mxu0 0
      %955 = vmatprep.subr.bf16.mxu0 0
      %956 = vmatpush1.bf16.msra.mxu0 0
      %957 = vmatprep.subr.bf16.mxu0 0
      %958 = vmatpush1.bf16.msra.mxu0 0
      %959 = vmatprep.subr.bf16.mxu0 0
      %960 = vmatpush1.bf16.msra.mxu0 0
      %961 = vmatprep.subr.bf16.mxu0 0
      %962 = vmatpush1.bf16.msra.mxu0 0
      %963 = vmatprep.subr.bf16.mxu0 0
      %964 = vmatpush1.bf16.msra.mxu0 0
      %965 = vmatprep.subr.bf16.mxu0 0
      %966 = vmatpush1.bf16.msra.mxu0 0
      %967 = vmatprep.subr.bf16.mxu0 0
      %968 = vmatpush1.bf16.msra.mxu0 0
      %969 = vmatprep.subr.bf16.mxu0 0
      %970 = vmatpush1.bf16.msra.mxu0 0
      %971 = vmatprep.subr.bf16.mxu0 0
      %972 = vmatpush1.bf16.msra.mxu0 0
      %973 = vmatprep.subr.bf16.mxu0 0
      %974 = vmatpush1.bf16.msra.mxu0 0
      %975 = vmatprep.mubr.bf16.mxu0 0
      %976 = vmatmul.mubr.bf16.gmra.mrb[0].mxu0 %v891
      %v977 = vpop.f32.mrb[0].mxu0
      %v978 = vadd.f32 0.0, %v977
      %v979 = vpop.f32.mrb[0].mxu0
      %v980 = vpop.f32.mrb[0].mxu0
      %v981 = vpop.f32.mrb[0].mxu0
      %982 = vdwg.mxu0
      %v983 = vadd.f32 %v858, %v937
      %v984 = vadd.f32 %v859, %v939
      %v985 = vadd.f32 %v860, %v978
      %v986 = vld [vmem:[%s137] sm:$0x3f]
      %s987 = scalar_lea.vmem %s1, 28
      %v988 = vld [vmem:[%s987] sm:$0xf]
      %v990 = vcombine.high %v986, %v986
      %v992 = vunpack.c.l.s4 1983009808
      %v993 = vunpack.c.0.s8 %v992
      %v994 = vlaneseq
      %v995 = vshrl.u32 %v994, 7
      %v996 = vsub.s32 %v993, %v995
      %v997 = vrot.slane %v986, %v996
      %v999 = vunpack.c.l.s4 1983009808
      %v1000 = vunpack.c.0.s8 %v999
      %v1001 = vlaneseq
      %v1002 = vshrl.u32 %v1001, 7
      %v1003 = vsub.s32 %v1000, %v1002
      %v1004 = vrot.slane %v990, %v1003
      %v1005 = vcombine.high %v997, %v997
      %1006 = vrot.lane.b32.xlu0 %v997, 91
      %v1007 = vpop.permute.xlu0 %1006
      %1008 = vrot.lane.b32.xlu0 %v1005, 91
      %v1009 = vpop.permute.xlu0 %1008
      %1010 = vrot.lane.b32.xlu0 %v1004, 91
      %v1011 = vpop.permute.xlu0 %1010
      %vm1012 = vcmask 744448
      %v1013 = vsel %vm1012, %v1007, %v1009
      %v1014 = vsel %vm1012, %v1009, %v1011
      %v1016 = vsel %vm173, %v988, 0
      %v1019 = vsel %vm177, %v1013, 0
      %v1022 = vsel %vm177, %v1014, 0
      %v1025 = vsel %vm177, %v1011, 0
      %1027 = vmatprep.subr.bf16.mxu0 %v1022
      %1028 = vmatpush1.bf16.msra.mxu0 %v1019
      %1029 = vmatprep.subr.bf16.mxu0 0
      %1030 = vmatpush1.bf16.msra.mxu0 0
      %1031 = vmatprep.subr.bf16.mxu0 0
      %1032 = vmatpush1.bf16.msra.mxu0 0
      %1033 = vmatprep.subr.bf16.mxu0 0
      %1034 = vmatpush1.bf16.msra.mxu0 0
      %1035 = vmatprep.subr.bf16.mxu0 0
      %1036 = vmatpush1.bf16.msra.mxu0 0
      %1037 = vmatprep.subr.bf16.mxu0 0
      %1038 = vmatpush1.bf16.msra.mxu0 0
      %1039 = vmatprep.subr.bf16.mxu0 0
      %1040 = vmatpush1.bf16.msra.mxu0 0
      %1041 = vmatprep.subr.bf16.mxu0 0
      %1042 = vmatpush1.bf16.msra.mxu0 0
      %1043 = vmatprep.subr.bf16.mxu0 0
      %1044 = vmatpush1.bf16.msra.mxu0 0
      %1045 = vmatprep.subr.bf16.mxu0 0
      %1046 = vmatpush1.bf16.msra.mxu0 0
      %1047 = vmatprep.subr.bf16.mxu0 0
      %1048 = vmatpush1.bf16.msra.mxu0 0
      %1049 = vmatprep.subr.bf16.mxu0 0
      %1050 = vmatpush1.bf16.msra.mxu0 0
      %1051 = vmatprep.subr.bf16.mxu0 0
      %1052 = vmatpush1.bf16.msra.mxu0 0
      %1053 = vmatprep.subr.bf16.mxu0 0
      %1054 = vmatpush1.bf16.msra.mxu0 0
      %1055 = vmatprep.subr.bf16.mxu0 0
      %1056 = vmatpush1.bf16.msra.mxu0 0
      %1057 = vmatprep.subr.bf16.mxu0 0
      %1058 = vmatpush1.bf16.msra.mxu0 0
      %1059 = vmatprep.mubr.bf16.mxu0 0
      %1060 = vmatmul.mubr.bf16.gmra.mrb[0].mxu0 %v1016
      %v1061 = vpop.f32.mrb[0].mxu0
      %v1062 = vadd.f32 0.0, %v1061
      %v1063 = vpop.f32.mrb[0].mxu0
      %v1064 = vadd.f32 0.0, %v1063
      %v1065 = vpop.f32.mrb[0].mxu0
      %v1066 = vpop.f32.mrb[0].mxu0
      %1067 = vdwg.mxu0
      %1068 = vmatprep.subr.bf16.mxu0 0
      %1069 = vmatpush1.bf16.msra.mxu0 %v1025
      %1070 = vmatprep.subr.bf16.mxu0 0
      %1071 = vmatpush1.bf16.msra.mxu0 0
      %1072 = vmatprep.subr.bf16.mxu0 0
      %1073 = vmatpush1.bf16.msra.mxu0 0
      %1074 = vmatprep.subr.bf16.mxu0 0
      %1075 = vmatpush1.bf16.msra.mxu0 0
      %1076 = vmatprep.subr.bf16.mxu0 0
      %1077 = vmatpush1.bf16.msra.mxu0 0
      %1078 = vmatprep.subr.bf16.mxu0 0
      %1079 = vmatpush1.bf16.msra.mxu0 0
      %1080 = vmatprep.subr.bf16.mxu0 0
      %1081 = vmatpush1.bf16.msra.mxu0 0
      %1082 = vmatprep.subr.bf16.mxu0 0
      %1083 = vmatpush1.bf16.msra.mxu0 0
      %1084 = vmatprep.subr.bf16.mxu0 0
      %1085 = vmatpush1.bf16.msra.mxu0 0
      %1086 = vmatprep.subr.bf16.mxu0 0
      %1087 = vmatpush1.bf16.msra.mxu0 0
      %1088 = vmatprep.subr.bf16.mxu0 0
      %1089 = vmatpush1.bf16.msra.mxu0 0
      %1090 = vmatprep.subr.bf16.mxu0 0
      %1091 = vmatpush1.bf16.msra.mxu0 0
      %1092 = vmatprep.subr.bf16.mxu0 0
      %1093 = vmatpush1.bf16.msra.mxu0 0
      %1094 = vmatprep.subr.bf16.mxu0 0
      %1095 = vmatpush1.bf16.msra.mxu0 0
      %1096 = vmatprep.subr.bf16.mxu0 0
      %1097 = vmatpush1.bf16.msra.mxu0 0
      %1098 = vmatprep.subr.bf16.mxu0 0
      %1099 = vmatpush1.bf16.msra.mxu0 0
      %1100 = vmatprep.mubr.bf16.mxu0 0
      %1101 = vmatmul.mubr.bf16.gmra.mrb[0].mxu0 %v1016
      %v1102 = vpop.f32.mrb[0].mxu0
      %v1103 = vadd.f32 0.0, %v1102
      %v1104 = vpop.f32.mrb[0].mxu0
      %v1105 = vpop.f32.mrb[0].mxu0
      %v1106 = vpop.f32.mrb[0].mxu0
      %1107 = vdwg.mxu0
      %v1108 = vadd.f32 %v983, %v1062
      %v1109 = vadd.f32 %v984, %v1064
      %v1110 = vadd.f32 %v985, %v1103
      %v1111 = vld [vmem:[%s137] sm:$0x3f]
      %s1112 = scalar_lea.vmem %s1, 32
      %v1113 = vld [vmem:[%s1112] sm:$0xf]
      %v1115 = vcombine.high %v1111, %v1111
      %v1117 = vunpack.c.l.s4 1983009808
      %v1118 = vunpack.c.0.s8 %v1117
      %v1119 = vlaneseq
      %v1120 = vshrl.u32 %v1119, 7
      %v1121 = vsub.s32 %v1118, %v1120
      %v1122 = vrot.slane %v1111, %v1121
      %v1124 = vunpack.c.l.s4 1983009808
      %v1125 = vunpack.c.0.s8 %v1124
      %v1126 = vlaneseq
      %v1127 = vshrl.u32 %v1126, 7
      %v1128 = vsub.s32 %v1125, %v1127
      %v1129 = vrot.slane %v1115, %v1128
      %v1130 = vcombine.high %v1122, %v1122
      %1131 = vrot.lane.b32.xlu0 %v1122, 90
      %v1132 = vpop.permute.xlu0 %1131
      %1133 = vrot.lane.b32.xlu0 %v1130, 90
      %v1134 = vpop.permute.xlu0 %1133
      %1135 = vrot.lane.b32.xlu0 %v1129, 90
      %v1136 = vpop.permute.xlu0 %1135
      %vm1137 = vcmask 736256
      %v1138 = vsel %vm1137, %v1132, %v1134
      %v1139 = vsel %vm1137, %v1134, %v1136
      %v1141 = vsel %vm173, %v1113, 0
      %v1144 = vsel %vm177, %v1138, 0
      %v1147 = vsel %vm177, %v1139, 0
      %v1150 = vsel %vm177, %v1136, 0
      %1152 = vmatprep.subr.bf16.mxu0 %v1147
      %1153 = vmatpush1.bf16.msra.mxu0 %v1144
      %1154 = vmatprep.subr.bf16.mxu0 0
      %1155 = vmatpush1.bf16.msra.mxu0 0
      %1156 = vmatprep.subr.bf16.mxu0 0
      %1157 = vmatpush1.bf16.msra.mxu0 0
      %1158 = vmatprep.subr.bf16.mxu0 0
      %1159 = vmatpush1.bf16.msra.mxu0 0
      %1160 = vmatprep.subr.bf16.mxu0 0
      %1161 = vmatpush1.bf16.msra.mxu0 0
      %1162 = vmatprep.subr.bf16.mxu0 0
      %1163 = vmatpush1.bf16.msra.mxu0 0
      %1164 = vmatprep.subr.bf16.mxu0 0
      %1165 = vmatpush1.bf16.msra.mxu0 0
      %1166 = vmatprep.subr.bf16.mxu0 0
      %1167 = vmatpush1.bf16.msra.mxu0 0
      %1168 = vmatprep.subr.bf16.mxu0 0
      %1169 = vmatpush1.bf16.msra.mxu0 0
      %1170 = vmatprep.subr.bf16.mxu0 0
      %1171 = vmatpush1.bf16.msra.mxu0 0
      %1172 = vmatprep.subr.bf16.mxu0 0
      %1173 = vmatpush1.bf16.msra.mxu0 0
      %1174 = vmatprep.subr.bf16.mxu0 0
      %1175 = vmatpush1.bf16.msra.mxu0 0
      %1176 = vmatprep.subr.bf16.mxu0 0
      %1177 = vmatpush1.bf16.msra.mxu0 0
      %1178 = vmatprep.subr.bf16.mxu0 0
      %1179 = vmatpush1.bf16.msra.mxu0 0
      %1180 = vmatprep.subr.bf16.mxu0 0
      %1181 = vmatpush1.bf16.msra.mxu0 0
      %1182 = vmatprep.subr.bf16.mxu0 0
      %1183 = vmatpush1.bf16.msra.mxu0 0
      %1184 = vmatprep.mubr.bf16.mxu0 0
      %1185 = vmatmul.mubr.bf16.gmra.mrb[0].mxu0 %v1141
      %v1186 = vpop.f32.mrb[0].mxu0
      %v1187 = vadd.f32 0.0, %v1186
      %v1188 = vpop.f32.mrb[0].mxu0
      %v1189 = vadd.f32 0.0, %v1188
      %v1190 = vpop.f32.mrb[0].mxu0
      %v1191 = vpop.f32.mrb[0].mxu0
      %1192 = vdwg.mxu0
      %1193 = vmatprep.subr.bf16.mxu0 0
      %1194 = vmatpush1.bf16.msra.mxu0 %v1150
      %1195 = vmatprep.subr.bf16.mxu0 0
      %1196 = vmatpush1.bf16.msra.mxu0 0
      %1197 = vmatprep.subr.bf16.mxu0 0
      %1198 = vmatpush1.bf16.msra.mxu0 0
      %1199 = vmatprep.subr.bf16.mxu0 0
      %1200 = vmatpush1.bf16.msra.mxu0 0
      %1201 = vmatprep.subr.bf16.mxu0 0
      %1202 = vmatpush1.bf16.msra.mxu0 0
      %1203 = vmatprep.subr.bf16.mxu0 0
      %1204 = vmatpush1.bf16.msra.mxu0 0
      %1205 = vmatprep.subr.bf16.mxu0 0
      %1206 = vmatpush1.bf16.msra.mxu0 0
      %1207 = vmatprep.subr.bf16.mxu0 0
      %1208 = vmatpush1.bf16.msra.mxu0 0
      %1209 = vmatprep.subr.bf16.mxu0 0
      %1210 = vmatpush1.bf16.msra.mxu0 0
      %1211 = vmatprep.subr.bf16.mxu0 0
      %1212 = vmatpush1.bf16.msra.mxu0 0
      %1213 = vmatprep.subr.bf16.mxu0 0
      %1214 = vmatpush1.bf16.msra.mxu0 0
      %1215 = vmatprep.subr.bf16.mxu0 0
      %1216 = vmatpush1.bf16.msra.mxu0 0
      %1217 = vmatprep.subr.bf16.mxu0 0
      %1218 = vmatpush1.bf16.msra.mxu0 0
      %1219 = vmatprep.subr.bf16.mxu0 0
      %1220 = vmatpush1.bf16.msra.mxu0 0
      %1221 = vmatprep.subr.bf16.mxu0 0
      %1222 = vmatpush1.bf16.msra.mxu0 0
      %1223 = vmatprep.subr.bf16.mxu0 0
      %1224 = vmatpush1.bf16.msra.mxu0 0
      %1225 = vmatprep.mubr.bf16.mxu0 0
      %1226 = vmatmul.mubr.bf16.gmra.mrb[0].mxu0 %v1141
      %v1227 = vpop.f32.mrb[0].mxu0
      %v1228 = vadd.f32 0.0, %v1227
      %v1229 = vpop.f32.mrb[0].mxu0
      %v1230 = vpop.f32.mrb[0].mxu0
      %v1231 = vpop.f32.mrb[0].mxu0
      %1232 = vdwg.mxu0
      %v1233 = vadd.f32 %v1108, %v1187
      %v1234 = vadd.f32 %v1109, %v1189
      %v1235 = vadd.f32 %v1110, %v1228
      %v1236 = vlaneseq
      %v1237 = vand.u32 %v1236, 127
      %v1238 = vadd.s32 %v1237, 128
      %v1239 = vadd.s32 %v1237, 256
      %vm1240 = vcmp.lt.s32.totalorder %v1237, 0
      %v1241 = vsub.s32 0, %v1237
      %v1242 = vsel %vm1240, %v1241, %v1237
      %v1243 = vmul.u32.u64.compose %v1242, 3817748708
      %v1244 = vextract.low.u32 %v1243
      %v1245 = vextract.high.u32 %v1243
      %v1246 = vshrl.u32 %v1245, 4
      %v1247 = vmul.u32 %v1246, 18
      %v1248 = vsub.s32 %v1242, %v1247
      %v1249 = vsub.s32 0, %v1248
      %v1250 = vsel %vm1240, %v1249, %v1248
      %vm1251 = vcmp.lt.s32.totalorder %v1238, 0
      %v1252 = vsub.s32 0, %v1238
      %v1253 = vsel %vm1251, %v1252, %v1238
      %v1254 = vmul.u32.u64.compose %v1253, 3817748708
      %v1255 = vextract.low.u32 %v1254
      %v1256 = vextract.high.u32 %v1254
      %v1257 = vshrl.u32 %v1256, 4
      %v1258 = vmul.u32 %v1257, 18
      %v1259 = vsub.s32 %v1253, %v1258
      %v1260 = vsub.s32 0, %v1259
      %v1261 = vsel %vm1251, %v1260, %v1259
      %vm1262 = vcmp.lt.s32.totalorder %v1239, 0
      %v1263 = vsub.s32 0, %v1239
      %v1264 = vsel %vm1262, %v1263, %v1239
      %v1265 = vmul.u32.u64.compose %v1264, 3817748708
      %v1266 = vextract.low.u32 %v1265
      %v1267 = vextract.high.u32 %v1265
      %v1268 = vshrl.u32 %v1267, 4
      %v1269 = vmul.u32 %v1268, 18
      %v1270 = vsub.s32 %v1264, %v1269
      %v1271 = vsub.s32 0, %v1270
      %v1272 = vsel %vm1262, %v1271, %v1270
      %vm1273 = vcmp.ne.s32.totalorder %v1250, 0
      %vm1274 = vcmp.ne.s32.totalorder %v1261, 0
      %vm1275 = vcmp.ne.s32.totalorder %v1272, 0
      %vm1276 = vcmp.lt.s32.totalorder %v1250, 0
      %vm1277 = vcmp.lt.s32.totalorder %v1261, 0
      %vm1278 = vcmp.lt.s32.totalorder %v1272, 0
      %vm1279 = vmand %vm1276, %vm1273
      %vm1280 = vmand %vm1277, %vm1274
      %vm1281 = vmand %vm1278, %vm1275
      %v1282 = vadd.s32 %v1250, 18
      %v1283 = vadd.s32 %v1261, 18
      %v1284 = vadd.s32 %v1272, 18
      %v1285 = vsel %vm1279, %v1282, %v1250
      %v1286 = vsel %vm1280, %v1283, %v1261
      %v1287 = vsel %vm1281, %v1284, %v1272
      %vm1288 = vcmp.lt.s32.totalorder %v1285, 16
      %vm1289 = vcmp.lt.s32.totalorder %v1286, 16
      %vm1290 = vcmp.lt.s32.totalorder %v1287, 16
      %v1291 = vsel %vm1288, %v1233, 0.0
      %v1292 = vsel %vm1289, %v1234, 0.0
      %v1293 = vsel %vm1290, %v1235, 0.0
      %v1294 = vadd.f32 %v1291, %v1292
      %vm1295 = vcmask 244736
      %v1296 = vsel %vm1295, %v1293, 0.0
      %v1297 = vadd.f32 %v1294, %v1296
      %1298 = vadd.xlane.f32.xlu0 %v1297
      %v1299 = vpop.xlane.xlu0 %1298
      %vm1300 = vcmask 7168
      %1301 = vst.msk [vmem:[%s141] sm:$0xff] %vm1300, %v1299
      %v1302 = vmul.f32 %v1291, %v1291
      %v1303 = vmul.f32 %v1292, %v1292
      %v1304 = vmul.f32 %v1293, %v1293
      %v1305 = vadd.f32 %v1302, %v1303
      %v1306 = vsel %vm1295, %v1304, 0.0
      %v1307 = vadd.f32 %v1305, %v1306
      %1308 = vadd.xlane.f32.xlu0 %v1307
      %v1309 = vpop.xlane.xlu0 %1308
      %vm1310 = vcmask 15368
      %1311 = vst.msk [vmem:[%s141] sm:$0xff] %vm1310, %v1309
      %p1312 = scmp.lt.s32.totalorder %s13, 1
      %s1313 = scalar_select %p1312, %s13, 1
      %s1314 = smul.addr %s1313, 8
      %s1315 = scalar_lea.vmem %s2, %s1314
      // Predicated region
      $region29: #{tpu_custom_call.1} parent=27 // pred_check
        %p1316 = pneg %p78
      $region30: #{tpu_custom_call.1} parent=27 // pred_check_branch
        %1318 = sbr.rel (%p1316) target = $region32
      $region31: #{tpu_custom_call.1} parent=27 // pred_region
        _
      $region32: #{tpu_custom_call.1} parent=27 // pred_fallthru
        _
    $region28: #{tpu_custom_call.1} parent=5 // pred_fallthru
      _
    %p1319 = scmp.le.s32.totalorder 2, %s8
    // Predicated region
    $region33: #{tpu_custom_call.1} parent=5 // pred_check
      %p1320 = pneg %p1319
    $region34: #{tpu_custom_call.1} parent=5 // pred_check_branch
      %1322 = sbr.rel (%p1320) target = $region36
    $region35: #{tpu_custom_call.1} parent=5 // pred_region
      %s1323 = ssub.s32 %s8, 2
      // Predicated region
      $region37: #{tpu_custom_call.1} parent=35 // pred_check
        %p1324 = pneg %p84
      $region38: #{tpu_custom_call.1} parent=35 // pred_check_branch
        %1326 = sbr.rel (%p1324) target = $region40
      $region39: #{tpu_custom_call.1} parent=35 // pred_region
        %p1327 = scmp.lt.s32.totalorder %s14, 1
        %s1328 = scalar_select %p1327, %s14, 1
        %s1329 = smul.addr %s1328, 8
        %s1330 = scalar_lea.vmem %s2, %s1329
      $region40: #{tpu_custom_call.1} parent=35 // pred_fallthru
        _
    $region36: #{tpu_custom_call.1} parent=5 // pred_fallthru
      _
  $region6: #{tpu_custom_call.1} parent=0 // loop_footer
    %s12 = sadd.s32 1, %s8
  $region7: #{tpu_custom_call.1} parent=0 // loop_footer_branch
    %7 = sbr.rel target = $region3
  $region8: #{tpu_custom_call.1} parent=0 // loop_exit
    _

</llo_original>
